<compile_context>
chip_gen: v5e
topology: v5e:2x2
jax: 0.10.0
libtpu: 0.0.40
codegen_flags: <defaults>
</compile_context>

<pallas_src>
import functools

import jax
import jax.numpy as jnp
from jax import lax
from jax.experimental import pallas as pl
from jax.experimental.pallas import tpu as pltpu

_LANE = 128
_MAX_TILE_L = 1024                      # lanes per block (multiple of 128)
_MAX_BLOCK_ELEMS = 512 * 1024           # ~2 MiB f32 per input block (v7x-safe)
_VMEM_LIMIT_BYTES = 32 * 1024 * 1024    # well under v7x's 64 MiB/TC


def _round_up(x, m):
    return (x + m - 1) // m * m


def _row_align(dtype):
    """Sublane granularity: 8 rows for 4-byte, 16 for 2-byte, 32 for 1-byte dtypes."""
    return 8 * max(1, 4 // jnp.dtype(dtype).itemsize)


def _focal_elem(x, t, alpha, gamma):
    """Elementwise focal loss; same formulation as the PyTorch module (f32 math)."""
    x = x.astype(jnp.float32)
    t = t.astype(jnp.float32)
    # sigmoid via a single EUP tanh (cheaper than exp + full-precision divide).
    p = 0.5 * (jnp.tanh(0.5 * x) + 1.0)
    q = jnp.maximum(1.0 - p, 0.0)          # guard: approx. sigmoid may overshoot 1
    log_p = jnp.log(p + 1e-10)
    log_q = jnp.log(q + 1e-10)
    if gamma == 2.0:                       # default: squares on the VPU, no EUP pow
        pow_q, pow_p = q * q, p * p
    elif gamma == 1.0:
        pow_q, pow_p = q, p
    elif gamma == 0.0:
        pow_q, pow_p = jnp.ones_like(q), jnp.ones_like(p)
    else:                                  # reuse logs: saves 2 EUP logs vs jnp.power
        pow_q, pow_p = jnp.exp(gamma * log_q), jnp.exp(gamma * log_p)
    return (-alpha) * (t * pow_q * log_p) - (1.0 - alpha) * ((1.0 - t) * pow_p * log_q)


def _focal_partial_sum_kernel(x_ref, t_ref, o_ref, *, alpha, gamma, n_rows, n_cols,
                              tile_b, tile_l, chunk_rows, unroll):
    """Per-block focal loss, tail-masked, reduced to an (8, 128) partial sum."""
    bi = pl.program_id(0)
    li = pl.program_id(1)
    col_ok = (li * tile_l
              + lax.broadcasted_iota(jnp.int32, (chunk_rows, tile_l), 1)) < n_cols
    row_iota = lax.broadcasted_iota(jnp.int32, (chunk_rows, tile_l), 0)
    row_base = bi * tile_b

    def body(k, acc):
        r0 = pl.multiple_of(k * chunk_rows, chunk_rows)
        mask = jnp.logical_and(row_base + r0 + row_iota < n_rows, col_ok)
        # Substitute safe values BEFORE the log chain (garbage tail reads could be
        # NaN/Inf, and 0 * NaN would survive a post-hoc mask), then mask AFTER.
        x = jnp.where(mask, x_ref[pl.ds(r0, chunk_rows), :].astype(jnp.float32), 0.0)
        t = jnp.where(mask, t_ref[pl.ds(r0, chunk_rows), :].astype(jnp.float32), 0.0)
        loss = _focal_elem(x, t, alpha, gamma)
        return acc + jnp.where(mask, loss, 0.0)

    acc = lax.fori_loop(0, tile_b // chunk_rows, body,
                        jnp.zeros((chunk_rows, tile_l), jnp.float32), unroll=unroll)

    # Fold sublanes down to 8 rows and lanes down to 128 columns (static slices).
    out = acc[0:8, :]
    for r in range(1, chunk_rows // 8):
        out = out + acc[r * 8:(r + 1) * 8, :]
    out2 = out[:, 0:_LANE]
    for m in range(1, tile_l // _LANE):
        out2 = out2 + out[:, m * _LANE:(m + 1) * _LANE]
    o_ref[...] = out2


def _focal_elementwise_kernel(x_ref, t_ref, o_ref, *, alpha, gamma,
                              tile_b, chunk_rows, unroll):
    """Per-element loss; boundary blocks are masked on writeback by Pallas."""
    def body(k, carry):
        r0 = pl.multiple_of(k * chunk_rows, chunk_rows)
        x = x_ref[pl.ds(r0, chunk_rows), :]
        t = t_ref[pl.ds(r0, chunk_rows), :]
        o_ref[pl.ds(r0, chunk_rows), :] = _focal_elem(x, t, alpha, gamma).astype(o_ref.dtype)
        return carry

    lax.fori_loop(0, tile_b // chunk_rows, body, 0, unroll=unroll)


def focal_loss(inputs, targets, *, alpha=0.25, gamma=2.0, reduction="mean"):
    """Pallas implementation of FocalLoss.forward. inputs/targets: (batch, length)."""
    assert inputs.shape == targets.shape
    orig_shape = inputs.shape
    if inputs.ndim == 1:
        inputs, targets = inputs.reshape(1, -1), targets.reshape(1, -1)
    elif inputs.ndim > 2:
        inputs = inputs.reshape(inputs.shape[0], -1)
        targets = targets.reshape(targets.shape[0], -1)
    B, L = inputs.shape
    total = B * L
    alpha = float(alpha)
    gamma = float(gamma)

    align = max(_row_align(inputs.dtype), _row_align(targets.dtype))
    tile_l = min(_round_up(L, _LANE), _MAX_TILE_L)
    max_tile_b = max(align, (_MAX_BLOCK_ELEMS // tile_l) // align * align)
    tile_b = min(_round_up(B, align), max_tile_b)
    chunk_rows = align
    trips = tile_b // chunk_rows
    unroll = trips <= 8
    grid = (pl.cdiv(B, tile_b), pl.cdiv(L, tile_l))

    in_specs = [pl.BlockSpec((tile_b, tile_l), lambda i, j: (i, j)),
                pl.BlockSpec((tile_b, tile_l), lambda i, j: (i, j))]
    cparams = pltpu.CompilerParams(
        dimension_semantics=("parallel", "parallel"),
        vmem_limit_bytes=_VMEM_LIMIT_BYTES)
    in_bytes = (inputs.size * inputs.dtype.itemsize
                + targets.size * targets.dtype.itemsize)

    if reduction in ("mean", "sum"):
        kernel = functools.partial(
            _focal_partial_sum_kernel, alpha=alpha, gamma=gamma, n_rows=B, n_cols=L,
            tile_b=tile_b, tile_l=tile_l, chunk_rows=chunk_rows, unroll=unroll)
        out_rows, out_cols = grid[0] * 8, grid[1] * _LANE
        partials = pl.pallas_call(
            kernel,
            out_shape=jax.ShapeDtypeStruct((out_rows, out_cols), jnp.float32),
            grid=grid,
            in_specs=in_specs,
            out_specs=pl.BlockSpec((8, _LANE), lambda i, j: (i, j)),
            compiler_params=cparams,
            cost_estimate=pl.CostEstimate(
                flops=14 * total, transcendentals=3 * total,
                bytes_accessed=in_bytes + out_rows * out_cols * 4),
        )(inputs, targets)
        total_sum = jnp.sum(partials)          # tiny final reduce in XLA
        if reduction == "mean":
            return total_sum / float(total)
        return total_sum

    # reduction == 'none': per-element loss, original shape, input dtype.
    out_dtype = inputs.dtype if jnp.issubdtype(inputs.dtype, jnp.floating) else jnp.float32
    kernel = functools.partial(
        _focal_elementwise_kernel, alpha=alpha, gamma=gamma,
        tile_b=tile_b, chunk_rows=chunk_rows, unroll=unroll)
    loss = pl.pallas_call(
        kernel,
        out_shape=jax.ShapeDtypeStruct((B, L), out_dtype),
        grid=grid,
        in_specs=in_specs,
        out_specs=pl.BlockSpec((tile_b, tile_l), lambda i, j: (i, j)),
        compiler_params=cparams,
        cost_estimate=pl.CostEstimate(
            flops=14 * total, transcendentals=3 * total,
            bytes_accessed=in_bytes + total * jnp.dtype(out_dtype).itemsize),
    )(inputs, targets)
    return loss.reshape(orig_shape)


def _ref_focal(inputs, targets, alpha=0.25, gamma=2.0):
    probs = jax.nn.sigmoid(inputs)
    log_probs = jnp.log(probs + 1e-10)
    log_probs_neg = jnp.log(1.0 - probs + 1e-10)
    return (-alpha * (targets * (1.0 - probs) ** gamma * log_probs)
            - (1.0 - alpha) * ((1.0 - targets) * probs ** gamma * log_probs_neg))


if __name__ == "__main__":
    key = jax.random.PRNGKey(0)
    k1, k2, k3, k4 = jax.random.split(key, 4)

    # Shapes consistent with the module: (batch, length).
    B, L = 2, 256
    inputs = jax.random.normal(k1, (B, L), dtype=jnp.float32)
    targets = (jax.random.uniform(k2, (B, L)) > 0.5).astype(jnp.float32)

    # reduction='mean' (module default)
    out = jax.block_until_ready(focal_loss(inputs, targets, alpha=0.25, gamma=2.0))
    ref = _ref_focal(inputs, targets).mean()
    assert bool(jnp.isfinite(out)), out
    assert jnp.allclose(out, ref, rtol=1e-4, atol=1e-5), (out, ref)

    # reduction='sum'
    out_s = jax.block_until_ready(focal_loss(inputs, targets, reduction="sum"))
    assert jnp.allclose(out_s, _ref_focal(inputs, targets).sum(), rtol=1e-4, atol=1e-3), out_s

    # reduction='none'
    loss_map = jax.block_until_ready(focal_loss(inputs, targets, reduction="none"))
    assert loss_map.shape == (B, L)
    assert jnp.allclose(loss_map, _ref_focal(inputs, targets), rtol=1e-4, atol=1e-5)

    # Ragged shape (neither dim (8,128)-aligned): exercises in-kernel tail masking.
    B2, L2 = 3, 200
    x2 = jax.random.normal(k3, (B2, L2), dtype=jnp.float32)
    t2 = (jax.random.uniform(k4, (B2, L2)) > 0.5).astype(jnp.float32)
    out2 = jax.block_until_ready(focal_loss(x2, t2))
    assert jnp.allclose(out2, _ref_focal(x2, t2).mean(), rtol=1e-4, atol=1e-5), out2
    loss2 = jax.block_until_ready(focal_loss(x2, t2, reduction="none"))
    assert loss2.shape == (B2, L2)
    assert jnp.allclose(loss2, _ref_focal(x2, t2), rtol=1e-4, atol=1e-5)

    print("KERNEL_OK")
</pallas_src>

<mosaic_0001>
module attributes {stable_mosaic.version = 11 : i64} {
  func.func @_focal_partial_sum_kernel(%arg0: i32, %arg1: i32, %arg2: memref<8x256xf32, #tpu.memory_space<vmem>>, %arg3: memref<8x256xf32, #tpu.memory_space<vmem>>, %arg4: memref<8x128xf32, #tpu.memory_space<vmem>>) attributes {dimension_semantics = [#tpu.dimension_semantics<parallel>, #tpu.dimension_semantics<parallel>], iteration_bounds = array<i64: 1, 1>, scalar_prefetch = 0 : i64, scratch_operands = 0 : i64, tpu.core_type = #tpu.core_type<tc>, window_params = [{transform_indices = @transform_0, window_bounds = array<i64: 8, 256>}, {transform_indices = @transform_1, window_bounds = array<i64: 8, 256>}, {transform_indices = @transform_2, window_bounds = array<i64: 8, 128>}]} {
    %c256_i32 = arith.constant 256 : i32
    %0 = arith.muli %arg1, %c256_i32 : i32
    %1 = tpu.iota {dimensions = array<i32: 1>} : vector<8x256xi32>
    %2 = vector.broadcast %0 : i32 to vector<8x256xi32>
    %3 = arith.addi %2, %1 : vector<8x256xi32>
    %c256_i32_0 = arith.constant 256 : i32
    %4 = vector.broadcast %c256_i32_0 : i32 to vector<8x256xi32>
    %5 = arith.cmpi slt, %3, %4 : vector<8x256xi32>
    %6 = tpu.iota {dimensions = array<i32: 0>} : vector<8x256xi32>
    %c8_i32 = arith.constant 8 : i32
    %7 = arith.muli %arg0, %c8_i32 : i32
    %cst = arith.constant 0.000000e+00 : f32
    %8 = vector.broadcast %cst : f32 to vector<8x256xf32>
    %c0_i32 = arith.constant 0 : i32
    %c8_i32_1 = arith.constant 8 : i32
    %9 = arith.muli %c0_i32, %c8_i32_1 : i32
    %10 = tpu.assume_multiple %9, 8 : i32
    %11 = arith.addi %7, %10 : i32
    %12 = vector.broadcast %11 : i32 to vector<8x256xi32>
    %13 = arith.addi %12, %6 : vector<8x256xi32>
    %c2_i32 = arith.constant 2 : i32
    %14 = vector.broadcast %c2_i32 : i32 to vector<8x256xi32>
    %15 = arith.cmpi slt, %13, %14 : vector<8x256xi32>
    %16 = arith.andi %15, %5 : vector<8x256xi1>
    %17 = arith.index_cast %10 : i32 to index
    %c0 = arith.constant 0 : index
    %18 = vector.load %arg2[%17, %c0] : memref<8x256xf32, #tpu.memory_space<vmem>>, vector<8x256xf32>
    %cst_2 = arith.constant 0.000000e+00 : f32
    %19 = vector.broadcast %cst_2 : f32 to vector<8x256xf32>
    %20 = arith.select %16, %18, %19 : vector<8x256xi1>, vector<8x256xf32>
    %21 = arith.index_cast %10 : i32 to index
    %c0_3 = arith.constant 0 : index
    %22 = vector.load %arg3[%21, %c0_3] : memref<8x256xf32, #tpu.memory_space<vmem>>, vector<8x256xf32>
    %cst_4 = arith.constant 0.000000e+00 : f32
    %23 = vector.broadcast %cst_4 : f32 to vector<8x256xf32>
    %24 = arith.select %16, %22, %23 : vector<8x256xi1>, vector<8x256xf32>
    %cst_5 = arith.constant 5.000000e-01 : f32
    %25 = vector.broadcast %cst_5 : f32 to vector<8x256xf32>
    %26 = arith.mulf %25, %20 : vector<8x256xf32>
    %27 = math.tanh %26 : vector<8x256xf32>
    %cst_6 = arith.constant 1.000000e+00 : f32
    %28 = vector.broadcast %cst_6 : f32 to vector<8x256xf32>
    %29 = arith.addf %27, %28 : vector<8x256xf32>
    %cst_7 = arith.constant 5.000000e-01 : f32
    %30 = vector.broadcast %cst_7 : f32 to vector<8x256xf32>
    %31 = arith.mulf %30, %29 : vector<8x256xf32>
    %cst_8 = arith.constant 1.000000e+00 : f32
    %32 = vector.broadcast %cst_8 : f32 to vector<8x256xf32>
    %33 = arith.subf %32, %31 : vector<8x256xf32>
    %cst_9 = arith.constant 0.000000e+00 : f32
    %34 = vector.broadcast %cst_9 : f32 to vector<8x256xf32>
    %35 = arith.maximumf %33, %34 : vector<8x256xf32>
    %cst_10 = arith.constant 1.000000e-10 : f32
    %36 = vector.broadcast %cst_10 : f32 to vector<8x256xf32>
    %37 = arith.addf %31, %36 : vector<8x256xf32>
    %38 = math.log %37 : vector<8x256xf32>
    %cst_11 = arith.constant 1.000000e-10 : f32
    %39 = vector.broadcast %cst_11 : f32 to vector<8x256xf32>
    %40 = arith.addf %35, %39 : vector<8x256xf32>
    %41 = math.log %40 : vector<8x256xf32>
    %42 = arith.mulf %35, %35 : vector<8x256xf32>
    %43 = arith.mulf %31, %31 : vector<8x256xf32>
    %44 = arith.mulf %24, %42 : vector<8x256xf32>
    %45 = arith.mulf %44, %38 : vector<8x256xf32>
    %cst_12 = arith.constant -2.500000e-01 : f32
    %46 = vector.broadcast %cst_12 : f32 to vector<8x256xf32>
    %47 = arith.mulf %46, %45 : vector<8x256xf32>
    %cst_13 = arith.constant 1.000000e+00 : f32
    %48 = vector.broadcast %cst_13 : f32 to vector<8x256xf32>
    %49 = arith.subf %48, %24 : vector<8x256xf32>
    %50 = arith.mulf %49, %43 : vector<8x256xf32>
    %51 = arith.mulf %50, %41 : vector<8x256xf32>
    %cst_14 = arith.constant 7.500000e-01 : f32
    %52 = vector.broadcast %cst_14 : f32 to vector<8x256xf32>
    %53 = arith.mulf %52, %51 : vector<8x256xf32>
    %54 = arith.subf %47, %53 : vector<8x256xf32>
    %cst_15 = arith.constant 0.000000e+00 : f32
    %55 = vector.broadcast %cst_15 : f32 to vector<8x256xf32>
    %56 = arith.select %16, %54, %55 : vector<8x256xi1>, vector<8x256xf32>
    %57 = arith.addf %8, %56 : vector<8x256xf32>
    %c1_i32 = arith.constant 1 : i32
    %58 = vector.extract_strided_slice %57 {offsets = [0, 0], sizes = [8, 128], strides = [1, 1]} : vector<8x256xf32> to vector<8x128xf32>
    %59 = vector.extract_strided_slice %57 {offsets = [0, 128], sizes = [8, 128], strides = [1, 1]} : vector<8x256xf32> to vector<8x128xf32>
    %60 = arith.addf %58, %59 : vector<8x128xf32>
    %c0_16 = arith.constant 0 : index
    %c0_17 = arith.constant 0 : index
    %61 = vector.load %arg4[%c0_16, %c0_17] : memref<8x128xf32, #tpu.memory_space<vmem>>, vector<8x128xf32>
    tpu.vector_store %arg4[%c0_16, %c0_17], %60 {strides = array<i32>} : memref<8x128xf32, #tpu.memory_space<vmem>>, vector<8x128xf32>,
    return
  }
  func.func @transform_0(%arg0: i32, %arg1: i32) -> (i32, i32) {
    %c0_i32 = arith.constant 0 : i32
    return %arg0, %arg1 : i32, i32
  }
  func.func @transform_1(%arg0: i32, %arg1: i32) -> (i32, i32) {
    %c0_i32 = arith.constant 0 : i32
    return %arg0, %arg1 : i32, i32
  }
  func.func @transform_2(%arg0: i32, %arg1: i32) -> (i32, i32) {
    %c0_i32 = arith.constant 0 : i32
    return %arg0, %arg1 : i32, i32
  }
}

</mosaic_0001>

<llo_original>
// kernel: tpu_custom_call.1
$region0: #{tpu_custom_call.1}
  #allocation0 [shape = 'u32[]', space=smem, size = 0x4, offset = 0x4, fixed_abs, tag = 'smem constant byte address 0x4 - core index']
  #allocation1 [shape = 'u32[72,128]{1,0:T(1,128)}', space=vmem, size = 0x9000, scoped, tag = 'internal scratch']
  %s0 = inlined_call_operand.hbm [shape: f32[2,256], index: 0, kind: input, shape index: {}]
  %s1 = inlined_call_operand.hbm [shape: f32[2,256], index: 1, kind: input, shape index: {}]
  %s2 = inlined_call_operand.hbm [shape: f32[8,128], index: 2, kind: output, shape index: {}]
  %s3 = sld [smem:[#allocation0]]
  $region26: #{tpu_custom_call.1} parent=0
    _
  %s5 = ssub.s32 1, %s3
  %s6 = scalar_select 0, %s5, %s3
  $region1: #{tpu_custom_call.1} parent=0
    #allocation2 [shape = 'u8[8192]{0}', space=vmem, size = 0x2000, scoped, tag = 'input window, operand 0, single buffered']
    #allocation3 [shape = 's32[1]{0}', space=sflag, size = 0x4, scoped, tag = 'scoped memory for tpu_custom_call.1']
    #allocation4 [shape = 's32[1]{0}', space=sflag, size = 0x4, scoped, tag = 'scoped memory for tpu_custom_call.1']
    #allocation5 [shape = 'u8[8192]{0}', space=vmem, size = 0x2000, scoped, tag = 'input window, operand 1, single buffered']
    #allocation6 [shape = 's32[1]{0}', space=sflag, size = 0x4, scoped, tag = 'scoped memory for tpu_custom_call.1']
    #allocation7 [shape = 'u8[4096]{0}', space=vmem, size = 0x1000, scoped, tag = 'output window, operand 0, single buffered']
    %7 = vsyncpa [#allocation3], 0
    %8 = vsyncpa [#allocation6], 0
    %9 = vsyncpa [#allocation4], 0
    // Predicated region
    $region2: #{tpu_custom_call.1} parent=1 // pred_check
      _
    $region3: #{tpu_custom_call.1} parent=1 // pred_check_branch
      %11 = sbr.rel (0) target = $region5
    $region4: #{tpu_custom_call.1} parent=1 // pred_region
      %13 = vsyncadd [#allocation3], 192
      %s14 = sshll.u32 %s0, 4
      %s15 = int_to_ptr.hbm [resolvable:$true] %s14
      %s16 = sshll.u32 [#allocation2], 4
      %s17 = int_to_ptr.vmem [resolvable:$true] %s16
      %22 = dma.hbm_to_vmem [thread:$0]  %s15, 64, %s17, [#allocation3], 64, 64, 4
    $region5: #{tpu_custom_call.1} parent=1 // pred_fallthru
      _
    // Predicated region
    $region6: #{tpu_custom_call.1} parent=1 // pred_check
      _
    $region7: #{tpu_custom_call.1} parent=1 // pred_check_branch
      %24 = sbr.rel (0) target = $region9
    $region8: #{tpu_custom_call.1} parent=1 // pred_region
      %26 = vsyncadd [#allocation6], 192
      %s27 = sshll.u32 %s1, 4
      %s28 = int_to_ptr.hbm [resolvable:$true] %s27
      %s29 = sshll.u32 [#allocation5], 4
      %s30 = int_to_ptr.vmem [resolvable:$true] %s29
      %35 = dma.hbm_to_vmem [thread:$0]  %s28, 64, %s30, [#allocation6], 64, 64, 4
    $region9: #{tpu_custom_call.1} parent=1 // pred_fallthru
      _
    // Predicated region
    $region10: #{tpu_custom_call.1} parent=1 // pred_check
      _
    $region11: #{tpu_custom_call.1} parent=1 // pred_check_branch
      %37 = sbr.rel (0) target = $region13
    $region12: #{tpu_custom_call.1} parent=1 // pred_region
      %39 = dma.done [#allocation3], 256
    $region13: #{tpu_custom_call.1} parent=1 // pred_fallthru
      _
    // Predicated region
    $region14: #{tpu_custom_call.1} parent=1 // pred_check
      _
    $region15: #{tpu_custom_call.1} parent=1 // pred_check_branch
      %41 = sbr.rel (0) target = $region17
    $region16: #{tpu_custom_call.1} parent=1 // pred_region
      %43 = dma.done [#allocation6], 256
    $region17: #{tpu_custom_call.1} parent=1 // pred_fallthru
      _
    %s44 = smul.u32 0, 256
    %v45 = vlaneseq
    %v46 = vand.u32 %v45, 127
    %v47 = vadd.s32 %v46, 128
    %v48 = vstv %s44
    %v49 = vadd.s32 %v48, %v46
    %v50 = vadd.s32 %v48, %v47
    %vm51 = vcmp.lt.s32.totalorder %v49, 256
    %vm52 = vcmp.lt.s32.totalorder %v50, 256
    %v53 = vlaneseq
    %v54 = vshrl.u32 %v53, 7
    %s55 = smul.u32 0, 8
    %s56 = sadd.s32 %s55, 0
    %v57 = vstv %s56
    %v58 = vadd.s32 %v57, %v54
    %vm59 = vcmp.lt.s32.totalorder %v58, 2
    %vm60 = vmand %vm59, %vm51
    %vm61 = vmand %vm59, %vm52
    %s62 = smul.u32 0, 2
    %s63 = smul.addr %s62, 2
    %s64 = scalar_lea.vmem [#allocation2], %s63
    %v65 = vld [vmem:[%s64] sm:$0xf]
    %v66 = vld [vmem:[%s64 + $0x4] sm:$0xf]
    %v67 = vld [vmem:[%s64 + $0x8] sm:$0xf]
    %v68 = vld [vmem:[%s64 + $0xc] sm:$0xf]
    %73 = vst [vmem:[#allocation1] ss:$4 sm:$0xff] %v65
    %s74 = scalar_lea.vmem [#allocation1], 1
    %75 = vst [vmem:[%s74] ss:$4 sm:$0xff] %v66
    %s76 = scalar_lea.vmem [#allocation1], 2
    %77 = vst [vmem:[%s76] ss:$4 sm:$0xff] %v67
    %s78 = scalar_lea.vmem [#allocation1], 3
    %79 = vst [vmem:[%s78] ss:$4 sm:$0xff] %v68
    %v80 = vld.sshfl [vmem:[#allocation1] sm:$0xff pattern:$0x73625140]
    %v81 = vld.sshfl [vmem:[#allocation1 + $0x8] sm:$0xff pattern:$0x73625140]
    %v84 = vsel %vm60, %v80, 0.0
    %v85 = vsel %vm61, %v81, 0.0
    %s86 = smul.addr %s62, 2
    %s87 = scalar_lea.vmem [#allocation5], %s86
    %v88 = vld [vmem:[%s87] sm:$0xf]
    %v89 = vld [vmem:[%s87 + $0x4] sm:$0xf]
    %v90 = vld [vmem:[%s87 + $0x8] sm:$0xf]
    %v91 = vld [vmem:[%s87 + $0xc] sm:$0xf]
    %96 = vst [vmem:[#allocation1] ss:$4 sm:$0xff] %v88
    %s97 = scalar_lea.vmem [#allocation1], 1
    %98 = vst [vmem:[%s97] ss:$4 sm:$0xff] %v89
    %s99 = scalar_lea.vmem [#allocation1], 2
    %100 = vst [vmem:[%s99] ss:$4 sm:$0xff] %v90
    %s101 = scalar_lea.vmem [#allocation1], 3
    %102 = vst [vmem:[%s101] ss:$4 sm:$0xff] %v91
    %v103 = vld.sshfl [vmem:[#allocation1] sm:$0xff pattern:$0x73625140]
    %v104 = vld.sshfl [vmem:[#allocation1 + $0x8] sm:$0xff pattern:$0x73625140]
    %v107 = vsel %vm60, %v103, 0.0
    %v108 = vsel %vm61, %v104, 0.0
    %v109 = vmul.f32 %v84, 0.5
    %v110 = vmul.f32 %v85, 0.5
    %v111 = vtanh.pop %v109
    %v112 = vtanh.pop %v110
    %v113 = vadd.f32 %v111, 1.0
    %v114 = vadd.f32 %v112, 1.0
    %v115 = vmul.f32 %v113, 0.5
    %v116 = vmul.f32 %v114, 0.5
    %v117 = vsub.f32 1.0, %v115
    %v118 = vsub.f32 1.0, %v116
    %v119 = vmax.f32 %v117, 0.0
    %v120 = vmax.f32 %v118, 0.0
    %v121 = vadd.f32 %v115, 1e-10
    %v122 = vadd.f32 %v116, 1e-10
    %v123 = vlog2.pop %v121
    %v124 = vmul.f32 %v123, 0.6931472
    %v125 = vlog2.pop %v122
    %v126 = vmul.f32 %v125, 0.6931472
    %v127 = vadd.f32 %v119, 1e-10
    %v128 = vadd.f32 %v120, 1e-10
    %v129 = vlog2.pop %v127
    %v130 = vmul.f32 %v129, 0.6931472
    %v131 = vlog2.pop %v128
    %v132 = vmul.f32 %v131, 0.6931472
    %v133 = vmul.f32 %v119, %v119
    %v134 = vmul.f32 %v120, %v120
    %v135 = vmul.f32 %v115, %v115
    %v136 = vmul.f32 %v116, %v116
    %v137 = vmul.f32 %v107, %v133
    %v138 = vmul.f32 %v108, %v134
    %v139 = vmul.f32 %v137, %v124
    %v140 = vmul.f32 %v138, %v126
    %v141 = vmul.f32 %v139, -0.25
    %v142 = vmul.f32 %v140, -0.25
    %v143 = vsub.f32 1.0, %v107
    %v144 = vsub.f32 1.0, %v108
    %v145 = vmul.f32 %v143, %v135
    %v146 = vmul.f32 %v144, %v136
    %v147 = vmul.f32 %v145, %v130
    %v148 = vmul.f32 %v146, %v132
    %v149 = vmul.f32 %v147, 0.75
    %v150 = vmul.f32 %v148, 0.75
    %v151 = vsub.f32 %v141, %v149
    %v152 = vsub.f32 %v142, %v150
    %v153 = vsel %vm60, %v151, 0.0
    %v154 = vsel %vm61, %v152, 0.0
    %v155 = vadd.f32 %v153, 0.0
    %v156 = vadd.f32 %v154, 0.0
    %v157 = vadd.f32 %v155, %v156
    %158 = vst [vmem:[#allocation7] sm:$0xff] %v157
    // Predicated region
    $region18: #{tpu_custom_call.1} parent=1 // pred_check
      _
    $region19: #{tpu_custom_call.1} parent=1 // pred_check_branch
      %160 = sbr.rel (0) target = $region21
    $region20: #{tpu_custom_call.1} parent=1 // pred_region
      %162 = vsyncadd [#allocation4], 0
      %s164 = sshll.u32 [#allocation7], 4
      %s165 = int_to_ptr.vmem [resolvable:$true] %s164
      %s166 = sshll.u32 %s2, 4
      %s167 = int_to_ptr.hbm [resolvable:$true] %s166
      %169 = dma.vmem_to_hbm [thread:$0]  %s165, 128, %s167, [#allocation4]
    $region21: #{tpu_custom_call.1} parent=1 // pred_fallthru
      _
    // Predicated region
    $region22: #{tpu_custom_call.1} parent=1 // pred_check
      _
    $region23: #{tpu_custom_call.1} parent=1 // pred_check_branch
      %171 = sbr.rel (0) target = $region25
    $region24: #{tpu_custom_call.1} parent=1 // pred_region
      %173 = dma.done [#allocation4], 128
    $region25: #{tpu_custom_call.1} parent=1 // pred_fallthru
      _
    %174 = vsyncpa [#allocation3], 1
    %175 = vsyncpa [#allocation6], 1
    %176 = vsyncpa [#allocation4], 1

</llo_original>
